<compile_context>
chip_gen: v7x
topology: tpu7x:2x2x1
jax: 0.10.0
libtpu: 0.0.40
codegen_flags: <defaults>
</compile_context>

<pallas_src>
import math

import jax
import jax.numpy as jnp
from jax.experimental import pallas as pl
from jax.experimental.pallas import tpu as pltpu

LOG_STD_MAX = 2.0
LOG_STD_MIN = -20.0
PROBS_MAX = 1.0
PROBS_MIN = 2e-5
UNIFORM_SIGMA = 3.46

# --- configuration mirroring SquashedGaussianActor.__init__ ---------------------
OBS_C = 4                    # obs_dim[0] (channels)
OBS_T = 8                    # obs_dim[1] (time length; power of 2)
CHANNEL_SIZES = (8, 8, 16)   # 8 -> 4 -> 2 -> 1 time steps
FC_SIZES = (32,)
ACT_DIM = 2
ACT_LOW = -2.0
ACT_HIGH = 2.0
# perform_norm=False (norm == Identity), as recommended by the module docstring.
# TODO(synk): odd-length replicate padding (t_len % 2) is not implemented; OBS_T is a
#             power of two in this configuration so that path never triggers.


def _round_up(x, m):
    return (x + m - 1) // m * m


# ---- output slab column layout (single lane-dense (N, OUT_W) output) -----------
COL_B = 0
COL_PI = 1
COL_P = COL_PI + 3 * ACT_DIM
COL_ENT = COL_P + 3
COL_LP = COL_ENT + 1
OUT_USED = COL_LP + 3
OUT_W = _round_up(OUT_USED, 8)


def _softplus(z):
    # numerically safe softplus, matches F.softplus semantics for our ranges
    return jnp.maximum(z, 0.0) + jnp.log(1.0 + jnp.exp(-jnp.abs(z)))


# =================================================================================
# Parameters: natural (torch-like) shapes + host-side packing into one slab
# =================================================================================
def init_params(key):
    """Deterministic synthetic parameters with the same shapes as the nn.Module."""
    keys = iter(jax.random.split(key, 64))

    def nrm(shape, scale=0.1):
        return scale * jax.random.normal(next(keys), shape, jnp.float32)

    params = {"blocks": [], "fc": [], "heads": []}
    all_ch = [OBS_C] + list(CHANNEL_SIZES)
    for i in range(len(CHANNEL_SIZES)):
        c_in, c_out = all_ch[i], all_ch[i + 1]
        blk = {"w_conv": nrm((c_out, c_in, 2)),      # Conv1d(c_in, c_out, 2, stride=2)
               "b_conv": nrm((c_out,), 0.05)}
        if c_in != c_out:
            blk["w_1x1"] = nrm((c_out, c_in))        # Conv1d 1x1 on the skip path
            blk["b_1x1"] = nrm((c_out,), 0.05)
        params["blocks"].append(blk)

    all_fc = [CHANNEL_SIZES[-1] + OBS_C] + list(FC_SIZES)
    for i in range(len(FC_SIZES)):
        params["fc"].append({"w": nrm((all_fc[i + 1], all_fc[i])),   # nn.Linear (out, in)
                             "b": nrm((all_fc[i + 1],), 0.05)})

    final = FC_SIZES[-1] if len(FC_SIZES) > 0 else CHANNEL_SIZES[-1] + OBS_C
    for out_dim in (ACT_DIM,) * 6 + (3,):            # mu0..2, log_std0..2, p
        params["heads"].append({"w": nrm((out_dim, final)), "b": nrm((out_dim,), 0.05)})
    return params


def pack_params(params):
    """Pack every parameter into ONE (rows, width) f32 slab (a single input DMA).

    Returns (slab, layout) where layout holds static row offsets used by the kernel.
    """
    C, T = OBS_C, OBS_T
    entries = []                       # (start_row, 2-D array)
    layout = {"blocks": [], "fc": []}
    cursor = 0

    def add(arrs):
        nonlocal cursor
        starts = []
        for a in arrs:
            entries.append((cursor, a))
            starts.append(cursor)
            cursor += a.shape[0]
        cursor = _round_up(cursor, 8)  # keep every section sublane-aligned
        return starts

    # ---- scale_input as a per-position affine: scaled = obs * mult + add --------
    a_vec = jnp.full((C,), -0.5, jnp.float32).at[-1].set(ACT_LOW)
    b_vec = jnp.full((C,), 0.5, jnp.float32).at[-1].set(ACT_HIGH)
    s_vec = jnp.ones((C,), jnp.float32).at[-1].set(UNIFORM_SIGMA)
    mult_c = s_vec / (b_vec - a_vec)
    add_c = s_vec * (-a_vec / (b_vec - a_vec) - 0.5)
    rows = add([jnp.tile(mult_c, T)[None, :], jnp.tile(add_c, T)[None, :]])
    layout["scale"] = rows[0]

    # ---- ReduceBlock levels: block-diagonal fused [conv | skip] weight per level --
    t_in, c_prev = T, C
    for blk, c_out in zip(params["blocks"], CHANNEL_SIZES):
        c_in = c_prev
        t_out = t_in // 2
        wc = blk["w_conv"]                                           # (c_out, c_in, 2)
        cat_conv = jnp.concatenate([wc[:, :, 0].T, wc[:, :, 1].T], axis=0)  # (2*c_in, c_out)
        if c_in == c_out:
            eye = jnp.eye(c_in, dtype=jnp.float32)
            cat_skip = 0.5 * jnp.concatenate([eye, eye], axis=0)      # avgpool + identity
            b_skip = jnp.zeros((c_out,), jnp.float32)
        else:
            w1 = blk["w_1x1"].T                                       # (c_in, c_out)
            cat_skip = 0.5 * jnp.concatenate([w1, w1], axis=0)        # avgpool + 1x1
            b_skip = blk["b_1x1"]
        H = t_out * c_out
        big = jnp.zeros((t_in * c_in, 2 * H), jnp.float32)
        for p in range(t_out):
            r0 = 2 * p * c_in
            big = big.at[r0:r0 + 2 * c_in, p * c_out:(p + 1) * c_out].set(cat_conv)
            big = big.at[r0:r0 + 2 * c_in, H + p * c_out:H + (p + 1) * c_out].set(cat_skip)
        b_big = jnp.concatenate([jnp.tile(blk["b_conv"], t_out),
                                 jnp.tile(b_skip, t_out)])[None, :]
        w_row, b_row = add([big, b_big])
        layout["blocks"].append({"w": w_row, "b": b_row,
                                 "in_w": t_in * c_in, "out_h": H})
        t_in, c_prev = t_out, c_out

    # ---- fc layers (first one consumes [conv_out, scaled_obs[:, :, -1]]) ---------
    for i, fc in enumerate(params["fc"]):
        wt = fc["w"].T                                                # (in, out)
        w_row, b_row = add([wt, fc["b"][None, :]])
        layout["fc"].append({"w": w_row, "b": b_row,
                             "in": int(wt.shape[0]), "out": int(wt.shape[1]),
                             "split": CHANNEL_SIZES[-1] if i == 0 else None})

    # ---- all 7 heads packed column-wise: [mu0|mu1|mu2|ls0|ls1|ls2|logits] --------
    w_heads = jnp.concatenate([h["w"].T for h in params["heads"]], axis=1)
    b_heads = jnp.concatenate([h["b"] for h in params["heads"]])[None, :]
    w_row, b_row = add([w_heads, b_heads])
    layout["heads"] = {"w": w_row, "b": b_row,
                       "in": int(w_heads.shape[0]), "out": int(w_heads.shape[1])}

    pad_w = max(int(a.shape[1]) for _, a in entries)
    slab = jnp.zeros((cursor, pad_w), jnp.float32)
    for row, a in entries:
        slab = slab.at[row:row + a.shape[0], :a.shape[1]].set(a.astype(jnp.float32))
    return slab, layout


# =================================================================================
# Kernel
# =================================================================================
def _make_kernel(layout, tile_n, deterministic, with_logprob):
    T, C, A = OBS_T, OBS_C, ACT_DIM
    tc = T * C
    log_half_range = math.log(0.5 * (ACT_HIGH - ACT_LOW))
    half_log_2pi = 0.5 * math.log(2.0 * math.pi)
    log2 = math.log(2.0)

    def kernel(*refs):
        if deterministic:
            param_ref, obs_ref, out_ref = refs
            noise_ref = None
        else:
            param_ref, obs_ref, noise_ref, out_ref = refs

        # ---- scale_input: one broadcast affine over the whole (tile_n, T*C) tile ----
        s = layout["scale"]
        mult = param_ref[s:s + 1, :tc]
        addv = param_ref[s + 1:s + 2, :tc]
        scaled = obs_ref[...] * mult + addv
        scaled_last = scaled[:, (T - 1) * C:tc]            # channels at the last time step

        # ---- halving_layers: ONE matmul per level (block-diag [conv|skip] weight) ----
        x = scaled                                         # (tile_n, t_in*c_in), t-major/c-minor
        for blk in layout["blocks"]:
            w = param_ref[blk["w"]:blk["w"] + blk["in_w"], :2 * blk["out_h"]]
            b = param_ref[blk["b"]:blk["b"] + 1, :2 * blk["out_h"]]
            z = jnp.dot(x, w, preferred_element_type=jnp.float32) + b
            h = blk["out_h"]
            x = jnp.maximum(z[:, :h], 0.0) + z[:, h:2 * h]  # relu(conv) + skip
        conv_out = x                                       # (tile_n, channel_sizes[-1])

        # first dense layer consumes [conv_out, scaled_last] via split dots (no lane concat)
        def split_dot(w_row, b_row, in_dim, out_dim, split):
            wa = param_ref[w_row:w_row + split, :out_dim]
            wb = param_ref[w_row + split:w_row + in_dim, :out_dim]
            bb = param_ref[b_row:b_row + 1, :out_dim]
            return (jnp.dot(conv_out, wa, preferred_element_type=jnp.float32)
                    + jnp.dot(scaled_last, wb, preferred_element_type=jnp.float32) + bb)

        hd = layout["heads"]
        if layout["fc"]:
            fc0 = layout["fc"][0]
            feat = jnp.maximum(
                split_dot(fc0["w"], fc0["b"], fc0["in"], fc0["out"], fc0["split"]), 0.0)
            for fcl in layout["fc"][1:]:
                w = param_ref[fcl["w"]:fcl["w"] + fcl["in"], :fcl["out"]]
                b = param_ref[fcl["b"]:fcl["b"] + 1, :fcl["out"]]
                feat = jnp.maximum(
                    jnp.dot(feat, w, preferred_element_type=jnp.float32) + b, 0.0)
            # all 7 heads fused into one matmul
            w = param_ref[hd["w"]:hd["w"] + hd["in"], :hd["out"]]
            b = param_ref[hd["b"]:hd["b"] + 1, :hd["out"]]
            heads = jnp.dot(feat, w, preferred_element_type=jnp.float32) + b
        else:
            heads = split_dot(hd["w"], hd["b"], hd["in"], hd["out"], CHANNEL_SIZES[-1])

        mu = heads[:, 0:3 * A]
        ls = jnp.clip(heads[:, 3 * A:6 * A], LOG_STD_MIN, LOG_STD_MAX)
        std = jnp.exp(ls)
        logits = heads[:, 6 * A:6 * A + 3]

        # ---- p head: softmax, clamp, exact renormalize ----
        zc = logits - jnp.max(logits, axis=-1, keepdims=True)
        ez = jnp.exp(zc)
        p = ez * pl.reciprocal(jnp.sum(ez, axis=-1, keepdims=True), approx=True)
        p = jnp.clip(p, PROBS_MIN, PROBS_MAX)
        p = p / jnp.sum(p, axis=-1, keepdims=True)

        p0, p1 = p[:, 0:1], p[:, 1:2]
        if deterministic:
            p2 = p[:, 2:3]
            b_act = jnp.where(p0 >= jnp.maximum(p1, p2), 0.0,
                              jnp.where(p1 >= p2, 1.0, 2.0))
            pre = mu
        else:
            # TODO(synk): torch's internal RNG (multinomial / randn) has no Pallas
            # equivalent; sampling uses host-provided uniform/normal noise
            # (inverse-CDF for the Categorical, reparameterization for the Normals).
            eps = noise_ref[:, 0:3 * A]
            u = noise_ref[:, 3 * A:3 * A + 1]
            b_act = (u >= p0).astype(jnp.float32) + (u >= p0 + p1).astype(jnp.float32)
            pre = mu + std * eps

        # squash + rescale into [ACT_LOW, ACT_HIGH] (all 3 heads at once)
        pi = ACT_LOW + 0.5 * (jnp.tanh(pre) + 1.0) * (ACT_HIGH - ACT_LOW)

        out_ref[:, COL_B:COL_B + 1] = b_act
        out_ref[:, COL_PI:COL_PI + 3 * A] = pi
        out_ref[:, COL_P:COL_P + 3] = p

        if with_logprob:
            inv_std = jnp.exp(-ls)                          # EUP exp instead of a VPU divide
            zn = (pre - mu) * inv_std
            corr = 2.0 * (log2 - pre - _softplus(-2.0 * pre))   # tanh change-of-variables
            term = -0.5 * zn * zn - ls - half_log_2pi - corr    # (tile_n, 3*A)
            out_ref[:, COL_ENT:COL_ENT + 1] = -jnp.sum(p * jnp.log(p), axis=-1, keepdims=True)
            for i in range(3):
                lp = (jnp.sum(term[:, i * A:(i + 1) * A], axis=-1, keepdims=True)
                      - log_half_range)                     # matches reference: subtracted once
                out_ref[:, COL_LP + i:COL_LP + i + 1] = lp
            if OUT_W > OUT_USED:
                out_ref[:, OUT_USED:OUT_W] = jnp.zeros((tile_n, OUT_W - OUT_USED), jnp.float32)
        else:
            out_ref[:, COL_ENT:OUT_W] = jnp.zeros((tile_n, OUT_W - COL_ENT), jnp.float32)

    return kernel


# =================================================================================
# Wrapper
# =================================================================================
def squashed_gaussian_actor_forward(obs, packed_params, key=None,
                                    deterministic=False, with_logprob=True):
    """obs: (N, C, T) float32 (PyTorch NCT layout). Returns the 9-tuple of the module."""
    slab, layout = packed_params
    N, C, T = obs.shape
    assert (C, T) == (OBS_C, OBS_T)
    A = ACT_DIM

    # (N, C, T) -> (N, T*C): one lane-dense obs row per sample (t-major, c-minor)
    obs_flat = jnp.transpose(obs, (0, 2, 1)).reshape(N, T * C).astype(jnp.float32)

    # batch grid: tiles stay tiny vs. VMEM on all generations (v5e/v6e/v7x); marked
    # parallel so v7x's two TensorCores each take a share of the batch.
    max_tile = 256
    if N <= max_tile:
        tile_n = _round_up(N, 8)
        n_pad = tile_n
    else:
        tile_n = max_tile
        n_pad = _round_up(N, max_tile)
    if n_pad != N:
        obs_flat = jnp.pad(obs_flat, ((0, n_pad - N), (0, 0)))
    grid = (n_pad // tile_n,)

    inputs = [slab, obs_flat]
    in_specs = [pl.BlockSpec(slab.shape, lambda i: (0, 0)),          # one resident param DMA
                pl.BlockSpec((tile_n, T * C), lambda i: (i, 0))]
    if not deterministic:
        keps, ku = jax.random.split(key)
        eps = jax.random.normal(keps, (n_pad, 3 * A), jnp.float32)   # eps0|eps1|eps2
        u = jax.random.uniform(ku, (n_pad, 1), jnp.float32)          # categorical uniform
        noise = jnp.concatenate([eps, u, jnp.zeros((n_pad, 1), jnp.float32)], axis=-1)
        inputs.append(noise)
        in_specs.append(pl.BlockSpec((tile_n, noise.shape[1]), lambda i: (i, 0)))

    kernel = _make_kernel(layout, tile_n, bool(deterministic), bool(with_logprob))
    out = pl.pallas_call(
        kernel,
        out_shape=jax.ShapeDtypeStruct((n_pad, OUT_W), jnp.float32),
        grid=grid,
        in_specs=in_specs,
        out_specs=pl.BlockSpec((tile_n, OUT_W), lambda i: (i, 0)),
        compiler_params=pltpu.CompilerParams(dimension_semantics=("parallel",)),
    )(*inputs)

    out = out[:N]
    b_act = out[:, COL_B]
    pi0 = out[:, COL_PI:COL_PI + A]
    pi1 = out[:, COL_PI + A:COL_PI + 2 * A]
    pi2 = out[:, COL_PI + 2 * A:COL_PI + 3 * A]
    p = out[:, COL_P:COL_P + 3]
    if with_logprob:
        ent = out[:, COL_ENT]
        lp0 = out[:, COL_LP]
        lp1 = out[:, COL_LP + 1]
        lp2 = out[:, COL_LP + 2]
    else:
        ent = lp0 = lp1 = lp2 = None
    return b_act, pi0, pi1, pi2, p, ent, lp0, lp1, lp2


if __name__ == "__main__":
    key = jax.random.PRNGKey(0)
    k_obs, k_params, k_noise = jax.random.split(key, 3)

    N = 2
    # first C-1 channels in [0, 1] (one-hot-ish), last channel in [ACT_LOW, ACT_HIGH]
    obs01 = jax.random.uniform(k_obs, (N, OBS_C, OBS_T), jnp.float32)
    last_ch = ACT_LOW + (ACT_HIGH - ACT_LOW) * obs01[:, -1:, :]
    obs = jnp.concatenate([obs01[:, :-1, :], last_ch], axis=1)       # (N, C, T)

    params = init_params(k_params)
    packed = pack_params(params)                                     # one-time host packing

    outs = squashed_gaussian_actor_forward(obs, packed, key=k_noise,
                                           deterministic=False, with_logprob=True)
    outs = jax.block_until_ready(outs)
    print("KERNEL_OK")
</pallas_src>

<mosaic_0001>
module attributes {stable_mosaic.version = 11 : i64} {
  func.func @kernel(%arg0: i32, %arg1: memref<176x64xf32, #tpu.memory_space<vmem>>, %arg2: memref<8x32xf32, #tpu.memory_space<vmem>>, %arg3: memref<8x8xf32, #tpu.memory_space<vmem>>, %arg4: memref<8x16xf32, #tpu.memory_space<vmem>>) attributes {dimension_semantics = [#tpu.dimension_semantics<parallel>], iteration_bounds = array<i64: 1>, scalar_prefetch = 0 : i64, scratch_operands = 0 : i64, tpu.core_type = #tpu.core_type<tc>, window_params = [{pipeline_mode = #tpu.pipeline_mode<synchronous>, transform_indices = @transform_0, window_bounds = array<i64: 176, 64>}, {transform_indices = @transform_1, window_bounds = array<i64: 8, 32>}, {transform_indices = @transform_2, window_bounds = array<i64: 8, 8>}, {transform_indices = @transform_3, window_bounds = array<i64: 8, 16>}]} {
    %c0 = arith.constant 0 : index
    %c0_0 = arith.constant 0 : index
    %0 = vector.load %arg1[%c0, %c0_0] : memref<176x64xf32, #tpu.memory_space<vmem>>, vector<1x32xf32>
    %c1 = arith.constant 1 : index
    %c0_1 = arith.constant 0 : index
    %1 = vector.load %arg1[%c1, %c0_1] : memref<176x64xf32, #tpu.memory_space<vmem>>, vector<1x32xf32>
    %c0_2 = arith.constant 0 : index
    %c0_3 = arith.constant 0 : index
    %2 = vector.load %arg2[%c0_2, %c0_3] : memref<8x32xf32, #tpu.memory_space<vmem>>, vector<8x32xf32>
    %3 = vector.broadcast %0 : vector<1x32xf32> to vector<8x32xf32>
    %4 = arith.mulf %2, %3 : vector<8x32xf32>
    %5 = vector.broadcast %1 : vector<1x32xf32> to vector<8x32xf32>
    %6 = arith.addf %4, %5 : vector<8x32xf32>
    %7 = vector.extract_strided_slice %6 {offsets = [0, 28], sizes = [8, 4], strides = [1, 1]} : vector<8x32xf32> to vector<8x4xf32>
    %c8 = arith.constant 8 : index
    %c0_4 = arith.constant 0 : index
    %8 = vector.load %arg1[%c8, %c0_4] : memref<176x64xf32, #tpu.memory_space<vmem>>, vector<32x64xf32>
    %c40 = arith.constant 40 : index
    %c0_5 = arith.constant 0 : index
    %9 = vector.load %arg1[%c40, %c0_5] : memref<176x64xf32, #tpu.memory_space<vmem>>, vector<1x64xf32>
    %cst = arith.constant dense<0.000000e+00> : vector<8x64xf32>
    %10 = tpu.matmul %6, %8, %cst {dimension_numbers = #tpu.dot_dimension_numbers<[1], [0], [0], [1], [0, 0, 1, 1], [], []>} : vector<8x32xf32>, vector<32x64xf32>, vector<8x64xf32> -> vector<8x64xf32>
    %11 = vector.broadcast %9 : vector<1x64xf32> to vector<8x64xf32>
    %12 = arith.addf %10, %11 : vector<8x64xf32>
    %13 = vector.extract_strided_slice %12 {offsets = [0, 0], sizes = [8, 32], strides = [1, 1]} : vector<8x64xf32> to vector<8x32xf32>
    %cst_6 = arith.constant 0.000000e+00 : f32
    %14 = vector.broadcast %cst_6 : f32 to vector<8x32xf32>
    %15 = arith.maximumf %13, %14 : vector<8x32xf32>
    %16 = vector.extract_strided_slice %12 {offsets = [0, 32], sizes = [8, 32], strides = [1, 1]} : vector<8x64xf32> to vector<8x32xf32>
    %17 = arith.addf %15, %16 : vector<8x32xf32>
    %c48 = arith.constant 48 : index
    %c0_7 = arith.constant 0 : index
    %18 = vector.load %arg1[%c48, %c0_7] : memref<176x64xf32, #tpu.memory_space<vmem>>, vector<32x32xf32>
    %c80 = arith.constant 80 : index
    %c0_8 = arith.constant 0 : index
    %19 = vector.load %arg1[%c80, %c0_8] : memref<176x64xf32, #tpu.memory_space<vmem>>, vector<1x32xf32>
    %cst_9 = arith.constant dense<0.000000e+00> : vector<8x32xf32>
    %20 = tpu.matmul %17, %18, %cst_9 {dimension_numbers = #tpu.dot_dimension_numbers<[1], [0], [0], [1], [0, 0, 1, 1], [], []>} : vector<8x32xf32>, vector<32x32xf32>, vector<8x32xf32> -> vector<8x32xf32>
    %21 = vector.broadcast %19 : vector<1x32xf32> to vector<8x32xf32>
    %22 = arith.addf %20, %21 : vector<8x32xf32>
    %23 = vector.extract_strided_slice %22 {offsets = [0, 0], sizes = [8, 16], strides = [1, 1]} : vector<8x32xf32> to vector<8x16xf32>
    %cst_10 = arith.constant 0.000000e+00 : f32
    %24 = vector.broadcast %cst_10 : f32 to vector<8x16xf32>
    %25 = arith.maximumf %23, %24 : vector<8x16xf32>
    %26 = vector.extract_strided_slice %22 {offsets = [0, 16], sizes = [8, 16], strides = [1, 1]} : vector<8x32xf32> to vector<8x16xf32>
    %27 = arith.addf %25, %26 : vector<8x16xf32>
    %c88 = arith.constant 88 : index
    %c0_11 = arith.constant 0 : index
    %28 = vector.load %arg1[%c88, %c0_11] : memref<176x64xf32, #tpu.memory_space<vmem>>, vector<16x32xf32>
    %c104 = arith.constant 104 : index
    %c0_12 = arith.constant 0 : index
    %29 = vector.load %arg1[%c104, %c0_12] : memref<176x64xf32, #tpu.memory_space<vmem>>, vector<1x32xf32>
    %cst_13 = arith.constant dense<0.000000e+00> : vector<8x32xf32>
    %30 = tpu.matmul %27, %28, %cst_13 {dimension_numbers = #tpu.dot_dimension_numbers<[1], [0], [0], [1], [0, 0, 1, 1], [], []>} : vector<8x16xf32>, vector<16x32xf32>, vector<8x32xf32> -> vector<8x32xf32>
    %31 = vector.broadcast %29 : vector<1x32xf32> to vector<8x32xf32>
    %32 = arith.addf %30, %31 : vector<8x32xf32>
    %33 = vector.extract_strided_slice %32 {offsets = [0, 0], sizes = [8, 16], strides = [1, 1]} : vector<8x32xf32> to vector<8x16xf32>
    %cst_14 = arith.constant 0.000000e+00 : f32
    %34 = vector.broadcast %cst_14 : f32 to vector<8x16xf32>
    %35 = arith.maximumf %33, %34 : vector<8x16xf32>
    %36 = vector.extract_strided_slice %32 {offsets = [0, 16], sizes = [8, 16], strides = [1, 1]} : vector<8x32xf32> to vector<8x16xf32>
    %37 = arith.addf %35, %36 : vector<8x16xf32>
    %c112 = arith.constant 112 : index
    %c0_15 = arith.constant 0 : index
    %38 = vector.load %arg1[%c112, %c0_15] : memref<176x64xf32, #tpu.memory_space<vmem>>, vector<16x32xf32>
    %c128 = arith.constant 128 : index
    %c0_16 = arith.constant 0 : index
    %39 = vector.load %arg1[%c128, %c0_16] : memref<176x64xf32, #tpu.memory_space<vmem>>, vector<4x32xf32>
    %c132 = arith.constant 132 : index
    %c0_17 = arith.constant 0 : index
    %40 = vector.load %arg1[%c132, %c0_17] : memref<176x64xf32, #tpu.memory_space<vmem>>, vector<1x32xf32>
    %cst_18 = arith.constant dense<0.000000e+00> : vector<8x32xf32>
    %41 = tpu.matmul %37, %38, %cst_18 {dimension_numbers = #tpu.dot_dimension_numbers<[1], [0], [0], [1], [0, 0, 1, 1], [], []>} : vector<8x16xf32>, vector<16x32xf32>, vector<8x32xf32> -> vector<8x32xf32>
    %cst_19 = arith.constant dense<0.000000e+00> : vector<8x32xf32>
    %42 = tpu.matmul %7, %39, %cst_19 {dimension_numbers = #tpu.dot_dimension_numbers<[1], [0], [0], [1], [0, 0, 1, 1], [], []>} : vector<8x4xf32>, vector<4x32xf32>, vector<8x32xf32> -> vector<8x32xf32>
    %43 = arith.addf %41, %42 : vector<8x32xf32>
    %44 = vector.broadcast %40 : vector<1x32xf32> to vector<8x32xf32>
    %45 = arith.addf %43, %44 : vector<8x32xf32>
    %cst_20 = arith.constant 0.000000e+00 : f32
    %46 = vector.broadcast %cst_20 : f32 to vector<8x32xf32>
    %47 = arith.maximumf %45, %46 : vector<8x32xf32>
    %c136 = arith.constant 136 : index
    %c0_21 = arith.constant 0 : index
    %48 = vector.load %arg1[%c136, %c0_21] : memref<176x64xf32, #tpu.memory_space<vmem>>, vector<32x15xf32>
    %c168 = arith.constant 168 : index
    %c0_22 = arith.constant 0 : index
    %49 = vector.load %arg1[%c168, %c0_22] : memref<176x64xf32, #tpu.memory_space<vmem>>, vector<1x15xf32>
    %cst_23 = arith.constant dense<0.000000e+00> : vector<8x15xf32>
    %50 = tpu.matmul %47, %48, %cst_23 {dimension_numbers = #tpu.dot_dimension_numbers<[1], [0], [0], [1], [0, 0, 1, 1], [], []>} : vector<8x32xf32>, vector<32x15xf32>, vector<8x15xf32> -> vector<8x15xf32>
    %51 = vector.broadcast %49 : vector<1x15xf32> to vector<8x15xf32>
    %52 = arith.addf %50, %51 : vector<8x15xf32>
    %53 = vector.extract_strided_slice %52 {offsets = [0, 0], sizes = [8, 6], strides = [1, 1]} : vector<8x15xf32> to vector<8x6xf32>
    %54 = vector.extract_strided_slice %52 {offsets = [0, 6], sizes = [8, 6], strides = [1, 1]} : vector<8x15xf32> to vector<8x6xf32>
    %cst_24 = arith.constant -2.000000e+01 : f32
    %cst_25 = arith.constant 2.000000e+00 : f32
    %55 = vector.broadcast %cst_24 : f32 to vector<8x6xf32>
    %56 = arith.maximumf %55, %54 : vector<8x6xf32>
    %57 = vector.broadcast %cst_25 : f32 to vector<8x6xf32>
    %58 = arith.minimumf %57, %56 : vector<8x6xf32>
    %59 = math.exp %58 : vector<8x6xf32>
    %60 = vector.extract_strided_slice %52 {offsets = [0, 12], sizes = [8, 3], strides = [1, 1]} : vector<8x15xf32> to vector<8x3xf32>
    %cst_26 = arith.constant dense<0xFF800000> : vector<8xf32>
    %61 = vector.multi_reduction <maximumf>, %60, %cst_26 [1] : vector<8x3xf32> to vector<8xf32>
    %62 = vector.shape_cast %61 : vector<8xf32> to vector<8x1xf32>
    %63 = vector.broadcast %62 : vector<8x1xf32> to vector<8x3xf32>
    %64 = arith.subf %60, %63 : vector<8x3xf32>
    %65 = math.exp %64 : vector<8x3xf32>
    %cst_27 = arith.constant dense<0.000000e+00> : vector<8xf32>
    %66 = vector.multi_reduction <add>, %65, %cst_27 [1] : vector<8x3xf32> to vector<8xf32>
    %67 = vector.shape_cast %66 : vector<8xf32> to vector<8x1xf32>
    %68 = tpu.reciprocal %67 {approx = true} : vector<8x1xf32> -> vector<8x1xf32>
    %69 = vector.broadcast %68 : vector<8x1xf32> to vector<8x3xf32>
    %70 = arith.mulf %65, %69 : vector<8x3xf32>
    %cst_28 = arith.constant 2.000000e-05 : f32
    %cst_29 = arith.constant 1.000000e+00 : f32
    %71 = vector.broadcast %cst_28 : f32 to vector<8x3xf32>
    %72 = arith.maximumf %71, %70 : vector<8x3xf32>
    %73 = vector.broadcast %cst_29 : f32 to vector<8x3xf32>
    %74 = arith.minimumf %73, %72 : vector<8x3xf32>
    %cst_30 = arith.constant dense<0.000000e+00> : vector<8xf32>
    %75 = vector.multi_reduction <add>, %74, %cst_30 [1] : vector<8x3xf32> to vector<8xf32>
    %76 = vector.shape_cast %75 : vector<8xf32> to vector<8x1xf32>
    %77 = vector.broadcast %76 : vector<8x1xf32> to vector<8x3xf32>
    %78 = arith.divf %74, %77 : vector<8x3xf32>
    %79 = vector.extract_strided_slice %78 {offsets = [0, 0], sizes = [8, 1], strides = [1, 1]} : vector<8x3xf32> to vector<8x1xf32>
    %80 = vector.extract_strided_slice %78 {offsets = [0, 1], sizes = [8, 1], strides = [1, 1]} : vector<8x3xf32> to vector<8x1xf32>
    %c0_31 = arith.constant 0 : index
    %c0_32 = arith.constant 0 : index
    %81 = vector.load %arg3[%c0_31, %c0_32] : memref<8x8xf32, #tpu.memory_space<vmem>>, vector<8x6xf32>
    %c0_33 = arith.constant 0 : index
    %c6 = arith.constant 6 : index
    %82 = vector.load %arg3[%c0_33, %c6] : memref<8x8xf32, #tpu.memory_space<vmem>>, vector<8x1xf32>
    %83 = arith.cmpf oge, %82, %79 : vector<8x1xf32>
    %84 = arith.extui %83 : vector<8x1xi1> to vector<8x1xi32>
    %85 = arith.sitofp %84 : vector<8x1xi32> to vector<8x1xf32>
    %86 = arith.addf %79, %80 : vector<8x1xf32>
    %87 = arith.cmpf oge, %82, %86 : vector<8x1xf32>
    %88 = arith.extui %87 : vector<8x1xi1> to vector<8x1xi32>
    %89 = arith.sitofp %88 : vector<8x1xi32> to vector<8x1xf32>
    %90 = arith.addf %85, %89 : vector<8x1xf32>
    %91 = arith.mulf %59, %81 : vector<8x6xf32>
    %92 = arith.addf %53, %91 : vector<8x6xf32>
    %93 = math.tanh %92 : vector<8x6xf32>
    %cst_34 = arith.constant 1.000000e+00 : f32
    %94 = vector.broadcast %cst_34 : f32 to vector<8x6xf32>
    %95 = arith.addf %93, %94 : vector<8x6xf32>
    %cst_35 = arith.constant 5.000000e-01 : f32
    %96 = vector.broadcast %cst_35 : f32 to vector<8x6xf32>
    %97 = arith.mulf %96, %95 : vector<8x6xf32>
    %cst_36 = arith.constant 4.000000e+00 : f32
    %98 = vector.broadcast %cst_36 : f32 to vector<8x6xf32>
    %99 = arith.mulf %97, %98 : vector<8x6xf32>
    %cst_37 = arith.constant -2.000000e+00 : f32
    %100 = vector.broadcast %cst_37 : f32 to vector<8x6xf32>
    %101 = arith.addf %100, %99 : vector<8x6xf32>
    %c0_38 = arith.constant 0 : index
    %c0_39 = arith.constant 0 : index
    %102 = vector.load %arg4[%c0_38, %c0_39] : memref<8x16xf32, #tpu.memory_space<vmem>>, vector<8x1xf32>
    tpu.vector_store %arg4[%c0_38, %c0_39], %90 {strides = array<i32>} : memref<8x16xf32, #tpu.memory_space<vmem>>, vector<8x1xf32>,
    %c0_40 = arith.constant 0 : index
    %c1_41 = arith.constant 1 : index
    %103 = vector.load %arg4[%c0_40, %c1_41] : memref<8x16xf32, #tpu.memory_space<vmem>>, vector<8x6xf32>
    tpu.vector_store %arg4[%c0_40, %c1_41], %101 {strides = array<i32>} : memref<8x16xf32, #tpu.memory_space<vmem>>, vector<8x6xf32>,
    %c0_42 = arith.constant 0 : index
    %c7 = arith.constant 7 : index
    %104 = vector.load %arg4[%c0_42, %c7] : memref<8x16xf32, #tpu.memory_space<vmem>>, vector<8x3xf32>
    tpu.vector_store %arg4[%c0_42, %c7], %78 {strides = array<i32>} : memref<8x16xf32, #tpu.memory_space<vmem>>, vector<8x3xf32>,
    %cst_43 = arith.constant 0.000000e+00 : f32
    %105 = vector.broadcast %cst_43 : f32 to vector<8x6xf32>
    %106 = arith.subf %105, %58 : vector<8x6xf32>
    %107 = math.exp %106 : vector<8x6xf32>
    %108 = arith.subf %92, %53 : vector<8x6xf32>
    %109 = arith.mulf %108, %107 : vector<8x6xf32>
    %cst_44 = arith.constant 0.693147182 : f32
    %110 = vector.broadcast %cst_44 : f32 to vector<8x6xf32>
    %111 = arith.subf %110, %92 : vector<8x6xf32>
    %cst_45 = arith.constant -2.000000e+00 : f32
    %112 = vector.broadcast %cst_45 : f32 to vector<8x6xf32>
    %113 = arith.mulf %112, %92 : vector<8x6xf32>
    %cst_46 = arith.constant 0.000000e+00 : f32
    %114 = vector.broadcast %cst_46 : f32 to vector<8x6xf32>
    %115 = arith.maximumf %113, %114 : vector<8x6xf32>
    %116 = math.absf %113 : vector<8x6xf32>
    %cst_47 = arith.constant 0.000000e+00 : f32
    %117 = vector.broadcast %cst_47 : f32 to vector<8x6xf32>
    %118 = arith.subf %117, %116 : vector<8x6xf32>
    %119 = math.exp %118 : vector<8x6xf32>
    %cst_48 = arith.constant 1.000000e+00 : f32
    %120 = vector.broadcast %cst_48 : f32 to vector<8x6xf32>
    %121 = arith.addf %120, %119 : vector<8x6xf32>
    %122 = math.log %121 : vector<8x6xf32>
    %123 = arith.addf %115, %122 : vector<8x6xf32>
    %124 = arith.subf %111, %123 : vector<8x6xf32>
    %cst_49 = arith.constant 2.000000e+00 : f32
    %125 = vector.broadcast %cst_49 : f32 to vector<8x6xf32>
    %126 = arith.mulf %125, %124 : vector<8x6xf32>
    %cst_50 = arith.constant -5.000000e-01 : f32
    %127 = vector.broadcast %cst_50 : f32 to vector<8x6xf32>
    %128 = arith.mulf %127, %109 : vector<8x6xf32>
    %129 = arith.mulf %128, %109 : vector<8x6xf32>
    %130 = arith.subf %129, %58 : vector<8x6xf32>
    %cst_51 = arith.constant 0.918938517 : f32
    %131 = vector.broadcast %cst_51 : f32 to vector<8x6xf32>
    %132 = arith.subf %130, %131 : vector<8x6xf32>
    %133 = arith.subf %132, %126 : vector<8x6xf32>
    %134 = math.log %78 : vector<8x3xf32>
    %135 = arith.mulf %78, %134 : vector<8x3xf32>
    %cst_52 = arith.constant dense<0.000000e+00> : vector<8xf32>
    %136 = vector.multi_reduction <add>, %135, %cst_52 [1] : vector<8x3xf32> to vector<8xf32>
    %137 = vector.shape_cast %136 : vector<8xf32> to vector<8x1xf32>
    %cst_53 = arith.constant 0.000000e+00 : f32
    %138 = vector.broadcast %cst_53 : f32 to vector<8x1xf32>
    %139 = arith.subf %138, %137 : vector<8x1xf32>
    %c0_54 = arith.constant 0 : index
    %c10 = arith.constant 10 : index
    %140 = vector.load %arg4[%c0_54, %c10] : memref<8x16xf32, #tpu.memory_space<vmem>>, vector<8x1xf32>
    tpu.vector_store %arg4[%c0_54, %c10], %139 {strides = array<i32>} : memref<8x16xf32, #tpu.memory_space<vmem>>, vector<8x1xf32>,
    %141 = vector.extract_strided_slice %133 {offsets = [0, 0], sizes = [8, 2], strides = [1, 1]} : vector<8x6xf32> to vector<8x2xf32>
    %cst_55 = arith.constant dense<0.000000e+00> : vector<8xf32>
    %142 = vector.multi_reduction <add>, %141, %cst_55 [1] : vector<8x2xf32> to vector<8xf32>
    %143 = vector.shape_cast %142 : vector<8xf32> to vector<8x1xf32>
    %cst_56 = arith.constant 0.693147182 : f32
    %144 = vector.broadcast %cst_56 : f32 to vector<8x1xf32>
    %145 = arith.subf %143, %144 : vector<8x1xf32>
    %c0_57 = arith.constant 0 : index
    %c11 = arith.constant 11 : index
    %146 = vector.load %arg4[%c0_57, %c11] : memref<8x16xf32, #tpu.memory_space<vmem>>, vector<8x1xf32>
    tpu.vector_store %arg4[%c0_57, %c11], %145 {strides = array<i32>} : memref<8x16xf32, #tpu.memory_space<vmem>>, vector<8x1xf32>,
    %147 = vector.extract_strided_slice %133 {offsets = [0, 2], sizes = [8, 2], strides = [1, 1]} : vector<8x6xf32> to vector<8x2xf32>
    %cst_58 = arith.constant dense<0.000000e+00> : vector<8xf32>
    %148 = vector.multi_reduction <add>, %147, %cst_58 [1] : vector<8x2xf32> to vector<8xf32>
    %149 = vector.shape_cast %148 : vector<8xf32> to vector<8x1xf32>
    %cst_59 = arith.constant 0.693147182 : f32
    %150 = vector.broadcast %cst_59 : f32 to vector<8x1xf32>
    %151 = arith.subf %149, %150 : vector<8x1xf32>
    %c0_60 = arith.constant 0 : index
    %c12 = arith.constant 12 : index
    %152 = vector.load %arg4[%c0_60, %c12] : memref<8x16xf32, #tpu.memory_space<vmem>>, vector<8x1xf32>
    tpu.vector_store %arg4[%c0_60, %c12], %151 {strides = array<i32>} : memref<8x16xf32, #tpu.memory_space<vmem>>, vector<8x1xf32>,
    %153 = vector.extract_strided_slice %133 {offsets = [0, 4], sizes = [8, 2], strides = [1, 1]} : vector<8x6xf32> to vector<8x2xf32>
    %cst_61 = arith.constant dense<0.000000e+00> : vector<8xf32>
    %154 = vector.multi_reduction <add>, %153, %cst_61 [1] : vector<8x2xf32> to vector<8xf32>
    %155 = vector.shape_cast %154 : vector<8xf32> to vector<8x1xf32>
    %cst_62 = arith.constant 0.693147182 : f32
    %156 = vector.broadcast %cst_62 : f32 to vector<8x1xf32>
    %157 = arith.subf %155, %156 : vector<8x1xf32>
    %c0_63 = arith.constant 0 : index
    %c13 = arith.constant 13 : index
    %158 = vector.load %arg4[%c0_63, %c13] : memref<8x16xf32, #tpu.memory_space<vmem>>, vector<8x1xf32>
    tpu.vector_store %arg4[%c0_63, %c13], %157 {strides = array<i32>} : memref<8x16xf32, #tpu.memory_space<vmem>>, vector<8x1xf32>,
    %cst_64 = arith.constant 0.000000e+00 : f32
    %159 = vector.broadcast %cst_64 : f32 to vector<8x2xf32>
    %c0_65 = arith.constant 0 : index
    %c14 = arith.constant 14 : index
    %160 = vector.load %arg4[%c0_65, %c14] : memref<8x16xf32, #tpu.memory_space<vmem>>, vector<8x2xf32>
    tpu.vector_store %arg4[%c0_65, %c14], %159 {strides = array<i32>} : memref<8x16xf32, #tpu.memory_space<vmem>>, vector<8x2xf32>,
    return
  }
  func.func @transform_0(%arg0: i32) -> (i32, i32) {
    %c0_i32 = arith.constant 0 : i32
    %c0_i32_0 = arith.constant 0 : i32
    %c0_i32_1 = arith.constant 0 : i32
    return %c0_i32, %c0_i32_0 : i32, i32
  }
  func.func @transform_1(%arg0: i32) -> (i32, i32) {
    %c0_i32 = arith.constant 0 : i32
    %c0_i32_0 = arith.constant 0 : i32
    return %arg0, %c0_i32 : i32, i32
  }
  func.func @transform_2(%arg0: i32) -> (i32, i32) {
    %c0_i32 = arith.constant 0 : i32
    %c0_i32_0 = arith.constant 0 : i32
    return %arg0, %c0_i32 : i32, i32
  }
  func.func @transform_3(%arg0: i32) -> (i32, i32) {
    %c0_i32 = arith.constant 0 : i32
    %c0_i32_0 = arith.constant 0 : i32
    return %arg0, %c0_i32 : i32, i32
  }
}

</mosaic_0001>

<llo_original>
// kernel: tpu_custom_call.1
$region0: #{tpu_custom_call.1}
  #allocation0 [shape = 'u32[]', space=smem, size = 0x4, offset = 0x4, fixed_abs, tag = 'smem constant byte address 0x4 - core index']
  #allocation1 [shape = 'u32[144,128]{1,0:T(1,128)}', space=vmem, size = 0x12000, scoped, tag = 'internal scratch']
  %s0 = inlined_call_operand.vmem [shape: f32[176,64], index: 0, kind: input, shape index: {}]
  %s1 = inlined_call_operand.vmem [shape: f32[8,32], index: 1, kind: input, shape index: {}]
  %s2 = inlined_call_operand.vmem [shape: f32[8,8], index: 2, kind: input, shape index: {}]
  %s3 = inlined_call_operand.hbm [shape: f32[8,16], index: 3, kind: output, shape index: {}]
  %s4 = sld [smem:[#allocation0]]
  $region22: #{tpu_custom_call.1} parent=0
    _
  %s6 = ssub.s32 1, %s4
  %s7 = scalar_select 0, %s6, %s4
  $region1: #{tpu_custom_call.1} parent=0
    #allocation2 [shape = 'u8[4096]{0}', space=vmem, size = 0x1000, scoped, tag = 'output window, operand 0, single buffered']
    #allocation3 [shape = 's32[1]{0}', space=sflag, size = 0x4, scoped, tag = 'scoped memory for tpu_custom_call.1']
    %8 = vsyncpa [#allocation3], 0
    // Predicated region
    $region2: #{tpu_custom_call.1} parent=1 // pred_check
      _
    $region3: #{tpu_custom_call.1} parent=1 // pred_check_branch
      %10 = sbr.rel (0) target = $region5
    $region4: #{tpu_custom_call.1} parent=1 // pred_region
      _
    $region5: #{tpu_custom_call.1} parent=1 // pred_fallthru
      _
    // Predicated region
    $region6: #{tpu_custom_call.1} parent=1 // pred_check
      _
    $region7: #{tpu_custom_call.1} parent=1 // pred_check_branch
      %12 = sbr.rel (0) target = $region9
    $region8: #{tpu_custom_call.1} parent=1 // pred_region
      _
    $region9: #{tpu_custom_call.1} parent=1 // pred_fallthru
      _
    // Predicated region
    $region10: #{tpu_custom_call.1} parent=1 // pred_check
      _
    $region11: #{tpu_custom_call.1} parent=1 // pred_check_branch
      %14 = sbr.rel (0) target = $region13
    $region12: #{tpu_custom_call.1} parent=1 // pred_region
      _
    $region13: #{tpu_custom_call.1} parent=1 // pred_fallthru
      _
    %v15 = vld [vmem:[%s0] sm:$0x1]
    %v16 = vld [vmem:[%s0 + $0x1] sm:$0x1]
    %v17 = vld [vmem:[%s1] sm:$0xff]
    %v18 = vlaneseq
    %v19 = vshrl.u32 %v18, 7
    %v20 = vsub.s32 0, %v19
    %v21 = vrot.slane %v15, %v20
    %v22 = vmul.f32 %v17, %v21
    %v23 = vlaneseq
    %v24 = vshrl.u32 %v23, 7
    %v25 = vsub.s32 0, %v24
    %v26 = vrot.slane %v16, %v25
    %v27 = vadd.f32 %v22, %v26
    %v28 = vld [vmem:[%s0 + $0x8] sm:$0xff]
    %v29 = vld [vmem:[%s0 + $0x10] sm:$0xff]
    %v30 = vld [vmem:[%s0 + $0x18] sm:$0xff]
    %v31 = vld [vmem:[%s0 + $0x20] sm:$0xff]
    %v32 = vld [vmem:[%s0 + $0x28] sm:$0x1]
    %v33 = vlaneseq
    %v34 = vshrl.u32 %v33, 7
    %v35 = vsub.s32 0, %v34
    %v36 = vrot.slane %v32, %v35
    %vm37 = vcmask 261120
    %v39 = vsel %vm37, %v27, 0
    %41 = vmatprep.subr.mxu0 0.0
    %42 = vmatpush1.msra.mxu0 %v28
    %43 = vmatprep.subr.mxu0 0.0
    %44 = vmatpush1.msra.mxu0 %v29
    %45 = vmatprep.subr.mxu0 0.0
    %46 = vmatpush1.msra.mxu0 %v30
    %47 = vmatprep.subr.mxu0 0.0
    %48 = vmatpush1.msra.mxu0 %v31
    %49 = vmatprep.subr.mxu0 0.0
    %50 = vmatpush1.msra.mxu0 0.0
    %51 = vmatprep.subr.mxu0 0.0
    %52 = vmatpush1.msra.mxu0 0.0
    %53 = vmatprep.subr.mxu0 0.0
    %54 = vmatpush1.msra.mxu0 0.0
    %55 = vmatprep.subr.mxu0 0.0
    %56 = vmatpush1.msra.mxu0 0.0
    %57 = vmatprep.subr.mxu0 0.0
    %58 = vmatpush1.msra.mxu0 0.0
    %59 = vmatprep.subr.mxu0 0.0
    %60 = vmatpush1.msra.mxu0 0.0
    %61 = vmatprep.subr.mxu0 0.0
    %62 = vmatpush1.msra.mxu0 0.0
    %63 = vmatprep.subr.mxu0 0.0
    %64 = vmatpush1.msra.mxu0 0.0
    %65 = vmatprep.subr.mxu0 0.0
    %66 = vmatpush1.msra.mxu0 0.0
    %67 = vmatprep.subr.mxu0 0.0
    %68 = vmatpush1.msra.mxu0 0.0
    %69 = vmatprep.subr.mxu0 0.0
    %70 = vmatpush1.msra.mxu0 0.0
    %71 = vmatprep.subr.mxu0 0.0
    %72 = vmatpush1.msra.mxu0 0.0
    %73 = vmatprep.subr.mxu0 0.0
    %74 = vmatpush1.msra.mxu0 0.0
    %75 = vmatprep.subr.mxu0 0.0
    %76 = vmatpush1.msra.mxu0 0.0
    %77 = vmatprep.subr.mxu0 0.0
    %78 = vmatpush1.msra.mxu0 0.0
    %79 = vmatprep.subr.mxu0 0.0
    %80 = vmatpush1.msra.mxu0 0.0
    %81 = vmatprep.subr.mxu0 0.0
    %82 = vmatpush1.msra.mxu0 0.0
    %83 = vmatprep.subr.mxu0 0.0
    %84 = vmatpush1.msra.mxu0 0.0
    %85 = vmatprep.subr.mxu0 0.0
    %86 = vmatpush1.msra.mxu0 0.0
    %87 = vmatprep.subr.mxu0 0.0
    %88 = vmatpush1.msra.mxu0 0.0
    %89 = vmatprep.subr.mxu0 0.0
    %90 = vmatpush1.msra.mxu0 0.0
    %91 = vmatprep.subr.mxu0 0.0
    %92 = vmatpush1.msra.mxu0 0.0
    %93 = vmatprep.subr.mxu0 0.0
    %94 = vmatpush1.msra.mxu0 0.0
    %95 = vmatprep.subr.mxu0 0.0
    %96 = vmatpush1.msra.mxu0 0.0
    %97 = vmatprep.subr.mxu0 0.0
    %98 = vmatpush1.msra.mxu0 0.0
    %99 = vmatprep.subr.mxu0 0.0
    %100 = vmatpush1.msra.mxu0 0.0
    %101 = vmatprep.subr.mxu0 0.0
    %102 = vmatpush1.msra.mxu0 0.0
    %103 = vmatprep.subr.mxu0 0.0
    %104 = vmatpush1.msra.mxu0 0.0
    %105 = vmatprep.mubr.f32.mxu0 0.0
    %106 = vmatmul.mubr.f32.gmra.mrb[0].mxu0 %v39
    %v107 = vpop.f32.mrb[0].mxu0
    %v108 = vadd.f32 %v36, %v107
    %v109 = vpop.f32.mrb[0].mxu0
    %110 = vdwg.mxu0
    %v111 = vmax.f32 %v108, 0.0
    %113 = vrot.lane.b32.xlu0 %v108, 96
    %v114 = vpop.permute.xlu0 %113
    %v116 = vadd.f32 %v111, %v114
    %v117 = vld [vmem:[%s0 + $0x30] sm:$0xff]
    %v118 = vld [vmem:[%s0 + $0x38] sm:$0xff]
    %v119 = vld [vmem:[%s0 + $0x40] sm:$0xff]
    %v120 = vld [vmem:[%s0 + $0x48] sm:$0xff]
    %v121 = vld [vmem:[%s0 + $0x50] sm:$0x1]
    %v122 = vlaneseq
    %v123 = vshrl.u32 %v122, 7
    %v124 = vsub.s32 0, %v123
    %v125 = vrot.slane %v121, %v124
    %v127 = vsel %vm37, %v116, 0
    %129 = vmatprep.subr.mxu0 0.0
    %130 = vmatpush1.msra.mxu0 %v117
    %131 = vmatprep.subr.mxu0 0.0
    %132 = vmatpush1.msra.mxu0 %v118
    %133 = vmatprep.subr.mxu0 0.0
    %134 = vmatpush1.msra.mxu0 %v119
    %135 = vmatprep.subr.mxu0 0.0
    %136 = vmatpush1.msra.mxu0 %v120
    %137 = vmatprep.subr.mxu0 0.0
    %138 = vmatpush1.msra.mxu0 0.0
    %139 = vmatprep.subr.mxu0 0.0
    %140 = vmatpush1.msra.mxu0 0.0
    %141 = vmatprep.subr.mxu0 0.0
    %142 = vmatpush1.msra.mxu0 0.0
    %143 = vmatprep.subr.mxu0 0.0
    %144 = vmatpush1.msra.mxu0 0.0
    %145 = vmatprep.subr.mxu0 0.0
    %146 = vmatpush1.msra.mxu0 0.0
    %147 = vmatprep.subr.mxu0 0.0
    %148 = vmatpush1.msra.mxu0 0.0
    %149 = vmatprep.subr.mxu0 0.0
    %150 = vmatpush1.msra.mxu0 0.0
    %151 = vmatprep.subr.mxu0 0.0
    %152 = vmatpush1.msra.mxu0 0.0
    %153 = vmatprep.subr.mxu0 0.0
    %154 = vmatpush1.msra.mxu0 0.0
    %155 = vmatprep.subr.mxu0 0.0
    %156 = vmatpush1.msra.mxu0 0.0
    %157 = vmatprep.subr.mxu0 0.0
    %158 = vmatpush1.msra.mxu0 0.0
    %159 = vmatprep.subr.mxu0 0.0
    %160 = vmatpush1.msra.mxu0 0.0
    %161 = vmatprep.subr.mxu0 0.0
    %162 = vmatpush1.msra.mxu0 0.0
    %163 = vmatprep.subr.mxu0 0.0
    %164 = vmatpush1.msra.mxu0 0.0
    %165 = vmatprep.subr.mxu0 0.0
    %166 = vmatpush1.msra.mxu0 0.0
    %167 = vmatprep.subr.mxu0 0.0
    %168 = vmatpush1.msra.mxu0 0.0
    %169 = vmatprep.subr.mxu0 0.0
    %170 = vmatpush1.msra.mxu0 0.0
    %171 = vmatprep.subr.mxu0 0.0
    %172 = vmatpush1.msra.mxu0 0.0
    %173 = vmatprep.subr.mxu0 0.0
    %174 = vmatpush1.msra.mxu0 0.0
    %175 = vmatprep.subr.mxu0 0.0
    %176 = vmatpush1.msra.mxu0 0.0
    %177 = vmatprep.subr.mxu0 0.0
    %178 = vmatpush1.msra.mxu0 0.0
    %179 = vmatprep.subr.mxu0 0.0
    %180 = vmatpush1.msra.mxu0 0.0
    %181 = vmatprep.subr.mxu0 0.0
    %182 = vmatpush1.msra.mxu0 0.0
    %183 = vmatprep.subr.mxu0 0.0
    %184 = vmatpush1.msra.mxu0 0.0
    %185 = vmatprep.subr.mxu0 0.0
    %186 = vmatpush1.msra.mxu0 0.0
    %187 = vmatprep.subr.mxu0 0.0
    %188 = vmatpush1.msra.mxu0 0.0
    %189 = vmatprep.subr.mxu0 0.0
    %190 = vmatpush1.msra.mxu0 0.0
    %191 = vmatprep.subr.mxu0 0.0
    %192 = vmatpush1.msra.mxu0 0.0
    %193 = vmatprep.mubr.f32.mxu0 0.0
    %194 = vmatmul.mubr.f32.gmra.mrb[0].mxu0 %v127
    %v195 = vpop.f32.mrb[0].mxu0
    %v196 = vadd.f32 %v125, %v195
    %v197 = vpop.f32.mrb[0].mxu0
    %198 = vdwg.mxu0
    %v199 = vmax.f32 %v196, 0.0
    %201 = vrot.lane.b32.xlu0 %v196, 112
    %v202 = vpop.permute.xlu0 %201
    %v204 = vadd.f32 %v199, %v202
    %v205 = vld [vmem:[%s0 + $0x58] sm:$0xff]
    %v206 = vld [vmem:[%s0 + $0x60] sm:$0xff]
    %v207 = vld [vmem:[%s0 + $0x68] sm:$0x1]
    %v208 = vlaneseq
    %v209 = vshrl.u32 %v208, 7
    %v210 = vsub.s32 0, %v209
    %v211 = vrot.slane %v207, %v210
    %vm212 = vcmask 130048
    %v214 = vsel %vm212, %v204, 0
    %216 = vmatprep.subr.mxu0 0.0
    %217 = vmatpush1.msra.mxu0 %v205
    %218 = vmatprep.subr.mxu0 0.0
    %219 = vmatpush1.msra.mxu0 %v206
    %220 = vmatprep.subr.mxu0 0.0
    %221 = vmatpush1.msra.mxu0 0.0
    %222 = vmatprep.subr.mxu0 0.0
    %223 = vmatpush1.msra.mxu0 0.0
    %224 = vmatprep.subr.mxu0 0.0
    %225 = vmatpush1.msra.mxu0 0.0
    %226 = vmatprep.subr.mxu0 0.0
    %227 = vmatpush1.msra.mxu0 0.0
    %228 = vmatprep.subr.mxu0 0.0
    %229 = vmatpush1.msra.mxu0 0.0
    %230 = vmatprep.subr.mxu0 0.0
    %231 = vmatpush1.msra.mxu0 0.0
    %232 = vmatprep.subr.mxu0 0.0
    %233 = vmatpush1.msra.mxu0 0.0
    %234 = vmatprep.subr.mxu0 0.0
    %235 = vmatpush1.msra.mxu0 0.0
    %236 = vmatprep.subr.mxu0 0.0
    %237 = vmatpush1.msra.mxu0 0.0
    %238 = vmatprep.subr.mxu0 0.0
    %239 = vmatpush1.msra.mxu0 0.0
    %240 = vmatprep.subr.mxu0 0.0
    %241 = vmatpush1.msra.mxu0 0.0
    %242 = vmatprep.subr.mxu0 0.0
    %243 = vmatpush1.msra.mxu0 0.0
    %244 = vmatprep.subr.mxu0 0.0
    %245 = vmatpush1.msra.mxu0 0.0
    %246 = vmatprep.subr.mxu0 0.0
    %247 = vmatpush1.msra.mxu0 0.0
    %248 = vmatprep.subr.mxu0 0.0
    %249 = vmatpush1.msra.mxu0 0.0
    %250 = vmatprep.subr.mxu0 0.0
    %251 = vmatpush1.msra.mxu0 0.0
    %252 = vmatprep.subr.mxu0 0.0
    %253 = vmatpush1.msra.mxu0 0.0
    %254 = vmatprep.subr.mxu0 0.0
    %255 = vmatpush1.msra.mxu0 0.0
    %256 = vmatprep.subr.mxu0 0.0
    %257 = vmatpush1.msra.mxu0 0.0
    %258 = vmatprep.subr.mxu0 0.0
    %259 = vmatpush1.msra.mxu0 0.0
    %260 = vmatprep.subr.mxu0 0.0
    %261 = vmatpush1.msra.mxu0 0.0
    %262 = vmatprep.subr.mxu0 0.0
    %263 = vmatpush1.msra.mxu0 0.0
    %264 = vmatprep.subr.mxu0 0.0
    %265 = vmatpush1.msra.mxu0 0.0
    %266 = vmatprep.subr.mxu0 0.0
    %267 = vmatpush1.msra.mxu0 0.0
    %268 = vmatprep.subr.mxu0 0.0
    %269 = vmatpush1.msra.mxu0 0.0
    %270 = vmatprep.subr.mxu0 0.0
    %271 = vmatpush1.msra.mxu0 0.0
    %272 = vmatprep.subr.mxu0 0.0
    %273 = vmatpush1.msra.mxu0 0.0
    %274 = vmatprep.subr.mxu0 0.0
    %275 = vmatpush1.msra.mxu0 0.0
    %276 = vmatprep.subr.mxu0 0.0
    %277 = vmatpush1.msra.mxu0 0.0
    %278 = vmatprep.subr.mxu0 0.0
    %279 = vmatpush1.msra.mxu0 0.0
    %280 = vmatprep.mubr.f32.mxu0 0.0
    %281 = vmatmul.mubr.f32.gmra.mrb[0].mxu0 %v214
    %v282 = vpop.f32.mrb[0].mxu0
    %v283 = vadd.f32 %v211, %v282
    %v284 = vpop.f32.mrb[0].mxu0
    %285 = vdwg.mxu0
    %v286 = vmax.f32 %v283, 0.0
    %288 = vrot.lane.b32.xlu0 %v283, 112
    %v289 = vpop.permute.xlu0 %288
    %v291 = vadd.f32 %v286, %v289
    %v292 = vld [vmem:[%s0 + $0x70] sm:$0xff]
    %v293 = vld [vmem:[%s0 + $0x78] sm:$0xff]
    %v294 = vld [vmem:[%s0 + $0x80] sm:$0xf]
    %v295 = vld [vmem:[%s0 + $0x84] sm:$0x1]
    %296 = vrot.lane.b32.xlu0 %v27, 100
    %v297 = vpop.permute.xlu0 %296
    %vm298 = vcmask 31744
    %v299 = vsel %vm298, %v297, 0
    %vm301 = vcmask 1043456
    %v303 = vsel %vm301, %v294, 0
    %305 = vmatprep.subr.mxu0 0.0
    %306 = vmatpush1.msra.mxu0 %v303
    %307 = vmatprep.subr.mxu0 0.0
    %308 = vmatpush1.msra.mxu0 0.0
    %309 = vmatprep.subr.mxu0 0.0
    %310 = vmatpush1.msra.mxu0 0.0
    %311 = vmatprep.subr.mxu0 0.0
    %312 = vmatpush1.msra.mxu0 0.0
    %313 = vmatprep.subr.mxu0 0.0
    %314 = vmatpush1.msra.mxu0 0.0
    %315 = vmatprep.subr.mxu0 0.0
    %316 = vmatpush1.msra.mxu0 0.0
    %317 = vmatprep.subr.mxu0 0.0
    %318 = vmatpush1.msra.mxu0 0.0
    %319 = vmatprep.subr.mxu0 0.0
    %320 = vmatpush1.msra.mxu0 0.0
    %321 = vmatprep.subr.mxu0 0.0
    %322 = vmatpush1.msra.mxu0 0.0
    %323 = vmatprep.subr.mxu0 0.0
    %324 = vmatpush1.msra.mxu0 0.0
    %325 = vmatprep.subr.mxu0 0.0
    %326 = vmatpush1.msra.mxu0 0.0
    %327 = vmatprep.subr.mxu0 0.0
    %328 = vmatpush1.msra.mxu0 0.0
    %329 = vmatprep.subr.mxu0 0.0
    %330 = vmatpush1.msra.mxu0 0.0
    %331 = vmatprep.subr.mxu0 0.0
    %332 = vmatpush1.msra.mxu0 0.0
    %333 = vmatprep.subr.mxu0 0.0
    %334 = vmatpush1.msra.mxu0 0.0
    %335 = vmatprep.subr.mxu0 0.0
    %336 = vmatpush1.msra.mxu0 0.0
    %337 = vmatprep.subr.mxu0 0.0
    %338 = vmatpush1.msra.mxu0 0.0
    %339 = vmatprep.subr.mxu0 0.0
    %340 = vmatpush1.msra.mxu0 0.0
    %341 = vmatprep.subr.mxu0 0.0
    %342 = vmatpush1.msra.mxu0 0.0
    %343 = vmatprep.subr.mxu0 0.0
    %344 = vmatpush1.msra.mxu0 0.0
    %345 = vmatprep.subr.mxu0 0.0
    %346 = vmatpush1.msra.mxu0 0.0
    %347 = vmatprep.subr.mxu0 0.0
    %348 = vmatpush1.msra.mxu0 0.0
    %349 = vmatprep.subr.mxu0 0.0
    %350 = vmatpush1.msra.mxu0 0.0
    %351 = vmatprep.subr.mxu0 0.0
    %352 = vmatpush1.msra.mxu0 0.0
    %353 = vmatprep.subr.mxu0 0.0
    %354 = vmatpush1.msra.mxu0 0.0
    %355 = vmatprep.subr.mxu0 0.0
    %356 = vmatpush1.msra.mxu0 0.0
    %357 = vmatprep.subr.mxu0 0.0
    %358 = vmatpush1.msra.mxu0 0.0
    %359 = vmatprep.subr.mxu0 0.0
    %360 = vmatpush1.msra.mxu0 0.0
    %361 = vmatprep.subr.mxu0 0.0
    %362 = vmatpush1.msra.mxu0 0.0
    %363 = vmatprep.subr.mxu0 0.0
    %364 = vmatpush1.msra.mxu0 0.0
    %365 = vmatprep.subr.mxu0 0.0
    %366 = vmatpush1.msra.mxu0 0.0
    %367 = vmatprep.subr.mxu0 0.0
    %368 = vmatpush1.msra.mxu0 0.0
    %369 = vmatprep.mubr.f32.mxu0 0.0
    %370 = vmatmul.mubr.f32.gmra.mrb[0].mxu0 %v299
    %v371 = vpop.f32.mrb[0].mxu0
    %v372 = vadd.f32 0.0, %v371
    %v373 = vpop.f32.mrb[0].mxu0
    %374 = vdwg.mxu0
    %v376 = vsel %vm212, %v291, 0
    %378 = vmatprep.subr.mxu0 0.0
    %379 = vmatpush1.msra.mxu0 %v292
    %380 = vmatprep.subr.mxu0 0.0
    %381 = vmatpush1.msra.mxu0 %v293
    %382 = vmatprep.subr.mxu0 0.0
    %383 = vmatpush1.msra.mxu0 0.0
    %384 = vmatprep.subr.mxu0 0.0
    %385 = vmatpush1.msra.mxu0 0.0
    %386 = vmatprep.subr.mxu0 0.0
    %387 = vmatpush1.msra.mxu0 0.0
    %388 = vmatprep.subr.mxu0 0.0
    %389 = vmatpush1.msra.mxu0 0.0
    %390 = vmatprep.subr.mxu0 0.0
    %391 = vmatpush1.msra.mxu0 0.0
    %392 = vmatprep.subr.mxu0 0.0
    %393 = vmatpush1.msra.mxu0 0.0
    %394 = vmatprep.subr.mxu0 0.0
    %395 = vmatpush1.msra.mxu0 0.0
    %396 = vmatprep.subr.mxu0 0.0
    %397 = vmatpush1.msra.mxu0 0.0
    %398 = vmatprep.subr.mxu0 0.0
    %399 = vmatpush1.msra.mxu0 0.0
    %400 = vmatprep.subr.mxu0 0.0
    %401 = vmatpush1.msra.mxu0 0.0
    %402 = vmatprep.subr.mxu0 0.0
    %403 = vmatpush1.msra.mxu0 0.0
    %404 = vmatprep.subr.mxu0 0.0
    %405 = vmatpush1.msra.mxu0 0.0
    %406 = vmatprep.subr.mxu0 0.0
    %407 = vmatpush1.msra.mxu0 0.0
    %408 = vmatprep.subr.mxu0 0.0
    %409 = vmatpush1.msra.mxu0 0.0
    %410 = vmatprep.subr.mxu0 0.0
    %411 = vmatpush1.msra.mxu0 0.0
    %412 = vmatprep.subr.mxu0 0.0
    %413 = vmatpush1.msra.mxu0 0.0
    %414 = vmatprep.subr.mxu0 0.0
    %415 = vmatpush1.msra.mxu0 0.0
    %416 = vmatprep.subr.mxu0 0.0
    %417 = vmatpush1.msra.mxu0 0.0
    %418 = vmatprep.subr.mxu0 0.0
    %419 = vmatpush1.msra.mxu0 0.0
    %420 = vmatprep.subr.mxu0 0.0
    %421 = vmatpush1.msra.mxu0 0.0
    %422 = vmatprep.subr.mxu0 0.0
    %423 = vmatpush1.msra.mxu0 0.0
    %424 = vmatprep.subr.mxu0 0.0
    %425 = vmatpush1.msra.mxu0 0.0
    %426 = vmatprep.subr.mxu0 0.0
    %427 = vmatpush1.msra.mxu0 0.0
    %428 = vmatprep.subr.mxu0 0.0
    %429 = vmatpush1.msra.mxu0 0.0
    %430 = vmatprep.subr.mxu0 0.0
    %431 = vmatpush1.msra.mxu0 0.0
    %432 = vmatprep.subr.mxu0 0.0
    %433 = vmatpush1.msra.mxu0 0.0
    %434 = vmatprep.subr.mxu0 0.0
    %435 = vmatpush1.msra.mxu0 0.0
    %436 = vmatprep.subr.mxu0 0.0
    %437 = vmatpush1.msra.mxu0 0.0
    %438 = vmatprep.subr.mxu0 0.0
    %439 = vmatpush1.msra.mxu0 0.0
    %440 = vmatprep.subr.mxu0 0.0
    %441 = vmatpush1.msra.mxu0 0.0
    %442 = vmatprep.mubr.f32.mxu0 0.0
    %443 = vmatmul.mubr.f32.gmra.mrb[0].mxu0 %v376
    %v444 = vpop.f32.mrb[0].mxu0
    %v445 = vadd.f32 %v372, %v444
    %v446 = vpop.f32.mrb[0].mxu0
    %447 = vdwg.mxu0
    %v448 = vlaneseq
    %v449 = vshrl.u32 %v448, 7
    %v450 = vsub.s32 0, %v449
    %v451 = vrot.slane %v295, %v450
    %v452 = vadd.f32 %v445, %v451
    %v453 = vmax.f32 %v452, 0.0
    %v454 = vld [vmem:[%s0 + $0x88] sm:$0xff]
    %v455 = vld [vmem:[%s0 + $0x90] sm:$0xff]
    %v456 = vld [vmem:[%s0 + $0x98] sm:$0xff]
    %v457 = vld [vmem:[%s0 + $0xa0] sm:$0xff]
    %v458 = vld [vmem:[%s0 + $0xa8] sm:$0x1]
    %v459 = vlaneseq
    %v460 = vshrl.u32 %v459, 7
    %v461 = vsub.s32 0, %v460
    %v462 = vrot.slane %v458, %v461
    %v464 = vsel %vm37, %v453, 0
    %466 = vmatprep.subr.mxu0 0.0
    %467 = vmatpush1.msra.mxu0 %v454
    %468 = vmatprep.subr.mxu0 0.0
    %469 = vmatpush1.msra.mxu0 %v455
    %470 = vmatprep.subr.mxu0 0.0
    %471 = vmatpush1.msra.mxu0 %v456
    %472 = vmatprep.subr.mxu0 0.0
    %473 = vmatpush1.msra.mxu0 %v457
    %474 = vmatprep.subr.mxu0 0.0
    %475 = vmatpush1.msra.mxu0 0.0
    %476 = vmatprep.subr.mxu0 0.0
    %477 = vmatpush1.msra.mxu0 0.0
    %478 = vmatprep.subr.mxu0 0.0
    %479 = vmatpush1.msra.mxu0 0.0
    %480 = vmatprep.subr.mxu0 0.0
    %481 = vmatpush1.msra.mxu0 0.0
    %482 = vmatprep.subr.mxu0 0.0
    %483 = vmatpush1.msra.mxu0 0.0
    %484 = vmatprep.subr.mxu0 0.0
    %485 = vmatpush1.msra.mxu0 0.0
    %486 = vmatprep.subr.mxu0 0.0
    %487 = vmatpush1.msra.mxu0 0.0
    %488 = vmatprep.subr.mxu0 0.0
    %489 = vmatpush1.msra.mxu0 0.0
    %490 = vmatprep.subr.mxu0 0.0
    %491 = vmatpush1.msra.mxu0 0.0
    %492 = vmatprep.subr.mxu0 0.0
    %493 = vmatpush1.msra.mxu0 0.0
    %494 = vmatprep.subr.mxu0 0.0
    %495 = vmatpush1.msra.mxu0 0.0
    %496 = vmatprep.subr.mxu0 0.0
    %497 = vmatpush1.msra.mxu0 0.0
    %498 = vmatprep.subr.mxu0 0.0
    %499 = vmatpush1.msra.mxu0 0.0
    %500 = vmatprep.subr.mxu0 0.0
    %501 = vmatpush1.msra.mxu0 0.0
    %502 = vmatprep.subr.mxu0 0.0
    %503 = vmatpush1.msra.mxu0 0.0
    %504 = vmatprep.subr.mxu0 0.0
    %505 = vmatpush1.msra.mxu0 0.0
    %506 = vmatprep.subr.mxu0 0.0
    %507 = vmatpush1.msra.mxu0 0.0
    %508 = vmatprep.subr.mxu0 0.0
    %509 = vmatpush1.msra.mxu0 0.0
    %510 = vmatprep.subr.mxu0 0.0
    %511 = vmatpush1.msra.mxu0 0.0
    %512 = vmatprep.subr.mxu0 0.0
    %513 = vmatpush1.msra.mxu0 0.0
    %514 = vmatprep.subr.mxu0 0.0
    %515 = vmatpush1.msra.mxu0 0.0
    %516 = vmatprep.subr.mxu0 0.0
    %517 = vmatpush1.msra.mxu0 0.0
    %518 = vmatprep.subr.mxu0 0.0
    %519 = vmatpush1.msra.mxu0 0.0
    %520 = vmatprep.subr.mxu0 0.0
    %521 = vmatpush1.msra.mxu0 0.0
    %522 = vmatprep.subr.mxu0 0.0
    %523 = vmatpush1.msra.mxu0 0.0
    %524 = vmatprep.subr.mxu0 0.0
    %525 = vmatpush1.msra.mxu0 0.0
    %526 = vmatprep.subr.mxu0 0.0
    %527 = vmatpush1.msra.mxu0 0.0
    %528 = vmatprep.subr.mxu0 0.0
    %529 = vmatpush1.msra.mxu0 0.0
    %530 = vmatprep.mubr.f32.mxu0 0.0
    %531 = vmatmul.mubr.f32.gmra.mrb[0].mxu0 %v464
    %v532 = vpop.f32.mrb[0].mxu0
    %v533 = vadd.f32 %v462, %v532
    %v534 = vpop.f32.mrb[0].mxu0
    %535 = vdwg.mxu0
    %v536 = vmax.f32 %v533, -20.0
    %v537 = vmin.f32 %v536, 2.0
    %v538 = vmul.f32 %v537, 1.442695
    %v539 = vpow.pop %v538
    %vm540 = vcmask 121952
    %v541 = vsel %vm540, %v533, -inf
    %542 = vmax.xlane.f32.xlu0 %v541
    %v543 = vpop.xlane.xlu0 %542
    %v544 = vsub.f32 %v533, %v543
    %v545 = vmul.f32 %v544, 1.442695
    %v546 = vpow.pop %v545
    %548 = vrot.lane.b32.xlu0 %v546, 116
    %v549 = vpop.permute.xlu0 %548
    %vm551 = vcmask 23552
    %v552 = vsel %vm551, %v549, 0.0
    %553 = vadd.xlane.f32.xlu0 %v552
    %v554 = vpop.xlane.xlu0 %553
    %v555 = vrcp.pop %v554
    %v556 = vmul.f32 %v546, %v555
    %v557 = vmax.f32 %v556, 2e-05
    %v558 = vmin.f32 %v557, 1.0
    %560 = vrot.lane.b32.xlu0 %v558, 116
    %v561 = vpop.permute.xlu0 %560
    %v563 = vsel %vm551, %v561, 0.0
    %564 = vadd.xlane.f32.xlu0 %v563
    %v565 = vpop.xlane.xlu0 %564
    %v566 = vrcp.pop %v565
    %v567 = vmul.f32 %v558, %v566
    %v568 = vld [vmem:[%s2] sm:$0xff]
    %570 = vrot.lane.b32.xlu0 %v567, 122
    %v571 = vpop.permute.xlu0 %570
    %vm573 = vcmp.ge.f32.partialorder %v568, %v571
    %v574 = vsel %vm573, 1, 0
    %v575 = vcvt.s32.f32 %v574
    %576 = vrot.lane.b32.xlu0 %v567, 127
    %v577 = vpop.permute.xlu0 %576
    %v579 = vadd.f32 %v567, %v577
    %581 = vrot.lane.b32.xlu0 %v579, 122
    %v582 = vpop.permute.xlu0 %581
    %vm584 = vcmp.ge.f32.partialorder %v568, %v582
    %v585 = vsel %vm584, 1, 0
    %v586 = vcvt.s32.f32 %v585
    %v587 = vadd.f32 %v575, %v586
    %589 = vrot.lane.b32.xlu0 %v568, 6
    %v590 = vpop.permute.xlu0 %589
    %v592 = vmul.f32 %v539, %v590
    %594 = vrot.lane.b32.xlu0 %v592, 122
    %v595 = vpop.permute.xlu0 %594
    %v597 = vadd.f32 %v533, %v595
    %v598 = vtanh.pop %v597
    %v599 = vadd.f32 %v598, 1.0
    %v600 = vmul.f32 %v599, 0.5
    %v601 = vmul.f32 %v600, 4.0
    %v602 = vadd.f32 %v601, -2.0
    %604 = vrot.lane.b32.xlu0 %v587, 122
    %v605 = vpop.permute.xlu0 %604
    %vm607 = vcmask 7168
    %608 = vst.msk [vmem:[#allocation2] sm:$0xff] %vm607, %v605
    %610 = vrot.lane.b32.xlu0 %v602, 1
    %v611 = vpop.permute.xlu0 %610
    %vm613 = vcmask 56328
    %614 = vst.msk [vmem:[#allocation2] sm:$0xff] %vm613, %v611
    %615 = vrot.lane.b32.xlu0 %v567, 123
    %v616 = vpop.permute.xlu0 %615
    %vm618 = vcmask 80952
    %619 = vst.msk [vmem:[#allocation2] sm:$0xff] %vm618, %v616
    %v620 = vsub.f32 0.0, %v537
    %v621 = vmul.f32 %v620, 1.442695
    %v622 = vpow.pop %v621
    %v623 = vsub.f32 %v597, %v533
    %625 = vrot.lane.b32.xlu0 %v622, 122
    %v626 = vpop.permute.xlu0 %625
    %v628 = vmul.f32 %v623, %v626
    %v629 = vsub.f32 0.6931472, %v597
    %v630 = vmul.f32 %v597, -2.0
    %v631 = vmax.f32 %v630, 0.0
    %v632 = vand.u32 2147483647, %v630
    %v633 = vsub.f32 0.0, %v632
    %v634 = vmul.f32 %v633, 1.442695
    %v635 = vpow.pop %v634
    %v636 = vadd.f32 %v635, 1.0
    %v637 = vlog2.pop %v636
    %v638 = vmul.f32 %v637, 0.6931472
    %v639 = vadd.f32 %v631, %v638
    %v640 = vsub.f32 %v629, %v639
    %v641 = vmul.f32 %v640, 2.0
    %v642 = vmul.f32 %v628, -0.5
    %v643 = vmul.f32 %v642, %v628
    %645 = vrot.lane.b32.xlu0 %v537, 122
    %v646 = vpop.permute.xlu0 %645
    %v648 = vsub.f32 %v643, %v646
    %v649 = vsub.f32 %v648, 0.9189385
    %v650 = vsub.f32 %v649, %v641
    %v651 = vlog2.pop %v567
    %v652 = vmul.f32 %v651, 0.6931472
    %v653 = vmul.f32 %v567, %v652
    %655 = vrot.lane.b32.xlu0 %v653, 116
    %v656 = vpop.permute.xlu0 %655
    %v658 = vsel %vm551, %v656, 0.0
    %659 = vadd.xlane.f32.xlu0 %v658
    %v660 = vpop.xlane.xlu0 %659
    %v661 = vsub.f32 0.0, %v660
    %vm662 = vcmask 89168
    %663 = vst.msk [vmem:[#allocation2] sm:$0xff] %vm662, %v661
    %vm664 = vcmask 15360
    %v665 = vsel %vm664, %v650, 0.0
    %666 = vadd.xlane.f32.xlu0 %v665
    %v667 = vpop.xlane.xlu0 %666
    %v668 = vsub.f32 %v667, 0.6931472
    %vm669 = vcmask 97368
    %670 = vst.msk [vmem:[#allocation2] sm:$0xff] %vm669, %v668
    %672 = vrot.lane.b32.xlu0 %v650, 126
    %v673 = vpop.permute.xlu0 %672
    %v675 = vsel %vm664, %v673, 0.0
    %676 = vadd.xlane.f32.xlu0 %v675
    %v677 = vpop.xlane.xlu0 %676
    %v678 = vsub.f32 %v677, 0.6931472
    %vm679 = vcmask 105568
    %680 = vst.msk [vmem:[#allocation2] sm:$0xff] %vm679, %v678
    %681 = vrot.lane.b32.xlu0 %v650, 124
    %v682 = vpop.permute.xlu0 %681
    %v684 = vsel %vm664, %v682, 0.0
    %685 = vadd.xlane.f32.xlu0 %v684
    %v686 = vpop.xlane.xlu0 %685
    %v687 = vsub.f32 %v686, 0.6931472
    %vm688 = vcmask 113768
    %689 = vst.msk [vmem:[#allocation2] sm:$0xff] %vm688, %v687
    %vm690 = vcmask 130160
    %691 = vst.msk [vmem:[#allocation2] sm:$0xff] %vm690, 0.0
    // Predicated region
    $region14: #{tpu_custom_call.1} parent=1 // pred_check
      _
    $region15: #{tpu_custom_call.1} parent=1 // pred_check_branch
      %693 = sbr.rel (0) target = $region17
    $region16: #{tpu_custom_call.1} parent=1 // pred_region
      %s695 = ssub.s32 128, 128
      %696 = vsyncadd [#allocation3], %s695
      %s698 = sshll.u32 [#allocation2], 4
      %s699 = int_to_ptr.vmem [resolvable:$true] %s698
      %701 = dma.vmem_to_hbm [thread:$0]  %s699, 128, %s3, [#allocation3]
    $region17: #{tpu_custom_call.1} parent=1 // pred_fallthru
      _
    // Predicated region
    $region18: #{tpu_custom_call.1} parent=1 // pred_check
      _
    $region19: #{tpu_custom_call.1} parent=1 // pred_check_branch
      %703 = sbr.rel (0) target = $region21
    $region20: #{tpu_custom_call.1} parent=1 // pred_region
      %704 = dma.done [#allocation3], 128
    $region21: #{tpu_custom_call.1} parent=1 // pred_fallthru
      _
    %705 = vsyncpa [#allocation3], 1

</llo_original>
